<compile_context>
chip_gen: v5e
topology: v5e:2x2
jax: 0.10.0
libtpu: 0.0.40
codegen_flags: <defaults>
</compile_context>

<pallas_src>
import functools
import math

import jax
import jax.numpy as jnp
from jax import lax
from jax.experimental import pallas as pl
from jax.experimental.pallas import tpu as pltpu

_PRECISION = lax.Precision.HIGHEST  # used in kernels AND reference for tight agreement


# ---------------------------------------------------------------------------
# Per-generation VMEM budget
# ---------------------------------------------------------------------------
def _vmem_budget():
    """~3/4 of physical VMEM (96 MiB on v5e/v6e's 128 MiB, 48 MiB on v7x's
    64 MiB), conservative 32 MiB fallback if the query is unavailable."""
    try:
        cap = int(pltpu.get_tpu_info().vmem_capacity_bytes)
        return int(min(cap * 3 // 4, 112 * 1024 * 1024))
    except Exception:  # pragma: no cover - older runtimes
        return 32 * 1024 * 1024


# ---------------------------------------------------------------------------
# Linear projection kernel: y = x @ W + b   (W stored as (d_in, d_out))
# ---------------------------------------------------------------------------
def _linear_kernel(x_ref, w_ref, b_ref, o_ref):
    y = jnp.dot(x_ref[...], w_ref[...],
                preferred_element_type=jnp.float32, precision=_PRECISION)
    y = y + b_ref[...]  # (1, d_out) broadcast, once per tile
    o_ref[...] = y.astype(o_ref.dtype)


def _pick_block_rows(rows, d_in, d_out, budget_bytes, *, itemsize=4, target=2048):
    """Largest row tile that amortizes the ~0.35us per-grid-step overhead while
    keeping double-buffered activation+output tiles PLUS the resident
    weight/bias inside the scoped-VMEM budget."""
    resident = 2 * (d_in * d_out + d_out) * itemsize          # weight + bias buffers
    avail = max(budget_bytes - resident, 2 * 1024 * 1024)
    per_row = 2 * (d_in + d_out) * itemsize                   # double-buffered in+out tile
    br = min(target, max(8, avail // per_row))
    br = max(8, (br // 8) * 8)                                # f32 sublane multiple
    return rows if br >= rows else br
    # TODO(synk): add d_out (N) tiling for d_model >= ~2K so the resident
    # weight itself fits v7x's 64 MiB VMEM.


def linear(x2, w, b, *, vmem_budget):
    """x2: (rows, d_in), w: (d_in, d_out), b: (d_out,) -> (rows, d_out)."""
    rows, d_in = x2.shape
    d_out = w.shape[1]
    br = _pick_block_rows(rows, d_in, d_out, vmem_budget)
    grid = (pl.cdiv(rows, br),)

    return pl.pallas_call(
        _linear_kernel,
        out_shape=jax.ShapeDtypeStruct((rows, d_out), x2.dtype),
        grid_spec=pltpu.PrefetchScalarGridSpec(
            num_scalar_prefetch=0,
            grid=grid,
            in_specs=[
                pl.BlockSpec((br, d_in), lambda i: (i, 0)),     # activation row tile
                pl.BlockSpec((d_in, d_out), lambda i: (0, 0)),  # weight (stays resident)
                pl.BlockSpec((1, d_out), lambda i: (0, 0)),     # bias   (stays resident)
            ],
            out_specs=pl.BlockSpec((br, d_out), lambda i: (i, 0)),
        ),
        compiler_params=pltpu.CompilerParams(
            # 'parallel' row axis -> shards grid across v7x's 2 TensorCores.
            dimension_semantics=("parallel",),
            vmem_limit_bytes=vmem_budget,
        ),
    )(x2, w, b.reshape(1, d_out))


# ---------------------------------------------------------------------------
# Attention: one batch per grid step, all heads in-kernel.
# ---------------------------------------------------------------------------
def _attend_heads(q, k, v, neg_mask, o_ref, p_ref, *, heads, d_k, scale):
    """q/k/v: (S, d_model) f32; writes o_ref (S, d_model), p_ref (H, S, S)."""
    ctx = []
    for h in range(heads):                      # static, unrolled head loop
        sl = slice(h * d_k, (h + 1) * d_k)
        qh, kh, vh = q[:, sl], k[:, sl], v[:, sl]
        # scores = (q @ k^T) * 1/sqrt(d_k) — contract d_k without transposing k.
        s = lax.dot_general(qh, kh, (((1,), (1,)), ((), ())),
                            preferred_element_type=jnp.float32,
                            precision=_PRECISION) * jnp.float32(scale)
        s = jnp.where(neg_mask, jnp.float32(-1e9), s)
        # Numerically-stable softmax; EUP approx reciprocal + one Newton step.
        m = jnp.max(s, axis=-1, keepdims=True)
        e = jnp.exp(s - m)
        denom = jnp.sum(e, axis=-1, keepdims=True)
        r = pl.reciprocal(denom, approx=True)
        r = r * (2.0 - denom * r)               # Newton refine -> f32-exact
        p = e * r
        p_ref[h, :, :] = p.astype(p_ref.dtype)
        ctx.append(jnp.dot(p, vh, preferred_element_type=jnp.float32,
                           precision=_PRECISION))
    # Single lane-dense (S, d_model) store instead of per-head d_k-wide stores.
    o_ref[...] = jnp.concatenate(ctx, axis=-1).astype(o_ref.dtype)


def _mha_fused_kernel(qkv_ref, mask_ref, o_ref, p_ref, *, heads, d_k, d_model, scale):
    neg = mask_ref[...] == 0                    # (S, S): loaded+compared once per batch
    qkv = qkv_ref[...]
    q = qkv[:, :d_model]
    k = qkv[:, d_model:2 * d_model]
    v = qkv[:, 2 * d_model:]
    _attend_heads(q, k, v, neg, o_ref, p_ref, heads=heads, d_k=d_k, scale=scale)


def _mha_split_kernel(q_ref, k_ref, v_ref, mask_ref, o_ref, p_ref, *, heads, d_k, scale):
    neg = mask_ref[...] == 0
    _attend_heads(q_ref[...], k_ref[...], v_ref[...], neg, o_ref, p_ref,
                  heads=heads, d_k=d_k, scale=scale)


def _attention_fused(qkv3, mask, *, heads, vmem_budget):
    """qkv3: (B, S, 3*d_model) slab [Q|K|V], mask: (B, 1, S, S)."""
    B, S, C = qkv3.shape
    d_model = C // 3
    d_k = d_model // heads
    kernel = functools.partial(_mha_fused_kernel, heads=heads, d_k=d_k,
                               d_model=d_model, scale=1.0 / math.sqrt(d_k))
    return pl.pallas_call(
        kernel,
        out_shape=(jax.ShapeDtypeStruct((B, S, d_model), qkv3.dtype),
                   jax.ShapeDtypeStruct((B, heads, S, S), qkv3.dtype)),
        grid_spec=pltpu.PrefetchScalarGridSpec(
            num_scalar_prefetch=0,
            grid=(B,),
            in_specs=[pl.BlockSpec((None, S, C), lambda b: (b, 0, 0)),
                      pl.BlockSpec((None, None, S, S), lambda b: (b, 0, 0, 0))],
            out_specs=[pl.BlockSpec((None, S, d_model), lambda b: (b, 0, 0)),
                       pl.BlockSpec((None, heads, S, S), lambda b: (b, 0, 0, 0))],
        ),
        compiler_params=pltpu.CompilerParams(
            dimension_semantics=("parallel",),
            vmem_limit_bytes=vmem_budget,
        ),
    )(qkv3, mask)


def _attention_split(q3, k3, v3, mask, *, heads, vmem_budget):
    """q3/k3/v3: (B, S, d_model) — no head-split transpose, heads indexed in-kernel."""
    B, S, d_model = q3.shape
    d_k = d_model // heads
    kernel = functools.partial(_mha_split_kernel, heads=heads, d_k=d_k,
                               scale=1.0 / math.sqrt(d_k))
    qkv_spec = pl.BlockSpec((None, S, d_model), lambda b: (b, 0, 0))
    return pl.pallas_call(
        kernel,
        out_shape=(jax.ShapeDtypeStruct((B, S, d_model), q3.dtype),
                   jax.ShapeDtypeStruct((B, heads, S, S), q3.dtype)),
        grid_spec=pltpu.PrefetchScalarGridSpec(
            num_scalar_prefetch=0,
            grid=(B,),
            in_specs=[qkv_spec, qkv_spec, qkv_spec,
                      pl.BlockSpec((None, None, S, S), lambda b: (b, 0, 0, 0))],
            out_specs=[pl.BlockSpec((None, S, d_model), lambda b: (b, 0, 0)),
                       pl.BlockSpec((None, heads, S, S), lambda b: (b, 0, 0, 0))],
        ),
        compiler_params=pltpu.CompilerParams(
            dimension_semantics=("parallel",),
            vmem_limit_bytes=vmem_budget,
        ),
    )(q3, k3, v3, mask)


# ---------------------------------------------------------------------------
# Full module forward
# ---------------------------------------------------------------------------
def multi_head_attention_forward(q, k, v, mask, params, heads):
    B, S, d_model = q.shape
    assert d_model % heads == 0, "d_model must be divisible by heads"
    rows = B * S
    vmem_budget = _vmem_budget()

    if q is k and k is v:
        # Self-attention: fused QKV projection (one activation read from HBM,
        # 3x-wide MXU matmul).  In a real module the stacked weight/bias would
        # be precomputed once at init.
        wqkv = jnp.concatenate([params["wq"], params["wk"], params["wv"]], axis=1)
        bqkv = jnp.concatenate([params["bq"], params["bk"], params["bv"]], axis=0)
        qkv = linear(q.reshape(rows, d_model), wqkv, bqkv, vmem_budget=vmem_budget)
        ctx, attn_probs = _attention_fused(
            qkv.reshape(B, S, 3 * d_model), mask, heads=heads, vmem_budget=vmem_budget)
    else:
        query = linear(q.reshape(rows, d_model), params["wq"], params["bq"],
                       vmem_budget=vmem_budget)
        key = linear(k.reshape(rows, d_model), params["wk"], params["bk"],
                     vmem_budget=vmem_budget)
        value = linear(v.reshape(rows, d_model), params["wv"], params["bv"],
                       vmem_budget=vmem_budget)
        ctx, attn_probs = _attention_split(
            query.reshape(B, S, d_model), key.reshape(B, S, d_model),
            value.reshape(B, S, d_model), mask, heads=heads, vmem_budget=vmem_budget)

    # TODO(synk): training-mode dropout on the attention probabilities
    # (pltpu.prng_seed / prng_random_bits) is omitted; this matches eval / p=0.0.
    out = linear(ctx.reshape(rows, d_model), params["wo"], params["bo"],
                 vmem_budget=vmem_budget)
    return out.reshape(B, S, d_model), attn_probs


# ---------------------------------------------------------------------------
# Pure-JAX reference (mirrors the PyTorch forward)
# ---------------------------------------------------------------------------
def _reference(q, k, v, mask, params, heads):
    B, S, d_model = q.shape
    dk = d_model // heads

    def lin(x, w, b):
        return jnp.dot(x, w, precision=_PRECISION) + b

    query = lin(q, params["wq"], params["bq"])
    key = lin(k, params["wk"], params["bk"])
    value = lin(v, params["wv"], params["bv"])

    def split(x):
        return x.reshape(B, S, heads, dk).transpose(0, 2, 1, 3)

    qh, kh, vh = split(query), split(key), split(value)
    scores = jnp.einsum("bhqd,bhkd->bhqk", qh, kh, precision=_PRECISION) / math.sqrt(dk)
    scores = jnp.where(mask == 0, -1e9, scores)
    probs = jax.nn.softmax(scores, axis=-1)
    ctx = jnp.einsum("bhqk,bhkd->bhqd", probs, vh, precision=_PRECISION)
    ctx = ctx.transpose(0, 2, 1, 3).reshape(B, S, d_model)
    return lin(ctx, params["wo"], params["bo"]), probs


if __name__ == "__main__":
    batch, seq_len, d_model, heads = 2, 8, 32, 4

    key0 = jax.random.PRNGKey(0)
    kx, kq, kk, kv, *pkeys = jax.random.split(key0, 4 + 8)

    x = jax.random.normal(kx, (batch, seq_len, d_model), jnp.float32)
    q = jax.random.normal(kq, (batch, seq_len, d_model), jnp.float32)
    k = jax.random.normal(kk, (batch, seq_len, d_model), jnp.float32)
    v = jax.random.normal(kv, (batch, seq_len, d_model), jnp.float32)

    # Causal mask (batch, 1, seq, seq): 1 = keep, 0 = masked (-> -1e9).
    causal = jnp.tril(jnp.ones((seq_len, seq_len), jnp.float32))
    mask = jnp.broadcast_to(causal, (batch, 1, seq_len, seq_len))

    # Deterministic parameter init (nn.Linear-style U(+-1/sqrt(d)))
    bound = 1.0 / math.sqrt(d_model)

    def init_w(kk_):
        return jax.random.uniform(kk_, (d_model, d_model), jnp.float32, -bound, bound)

    def init_b(kk_):
        return jax.random.uniform(kk_, (d_model,), jnp.float32, -bound, bound)

    params = {
        "wq": init_w(pkeys[0]), "bq": init_b(pkeys[1]),
        "wk": init_w(pkeys[2]), "bk": init_b(pkeys[3]),
        "wv": init_w(pkeys[4]), "bv": init_b(pkeys[5]),
        "wo": init_w(pkeys[6]), "bo": init_b(pkeys[7]),
    }

    # --- Self-attention (fused QKV path) ------------------------------------
    out, probs = multi_head_attention_forward(x, x, x, mask, params, heads)
    out = jax.block_until_ready(out)
    probs = jax.block_until_ready(probs)
    ref_out, ref_probs = _reference(x, x, x, mask, params, heads)
    assert out.shape == (batch, seq_len, d_model)
    assert probs.shape == (batch, heads, seq_len, seq_len)
    assert jnp.allclose(out, ref_out, atol=2e-4, rtol=2e-4), "self-attn output mismatch"
    assert jnp.allclose(probs, ref_probs, atol=2e-4, rtol=2e-4), "self-attn probs mismatch"

    # --- Cross-attention (separate q/k/v path) -------------------------------
    out2, probs2 = multi_head_attention_forward(q, k, v, mask, params, heads)
    out2 = jax.block_until_ready(out2)
    probs2 = jax.block_until_ready(probs2)
    ref_out2, ref_probs2 = _reference(q, k, v, mask, params, heads)
    assert jnp.allclose(out2, ref_out2, atol=2e-4, rtol=2e-4), "cross-attn output mismatch"
    assert jnp.allclose(probs2, ref_probs2, atol=2e-4, rtol=2e-4), "cross-attn probs mismatch"

    print("KERNEL_OK")
</pallas_src>

<mosaic_0001>
module attributes {stable_mosaic.version = 11 : i64} {
  func.func @_linear_kernel(%arg0: i32, %arg1: memref<16x32xf32, #tpu.memory_space<vmem>>, %arg2: memref<32x96xf32, #tpu.memory_space<vmem>>, %arg3: memref<1x96xf32, #tpu.memory_space<vmem>>, %arg4: memref<16x96xf32, #tpu.memory_space<vmem>>) attributes {dimension_semantics = [#tpu.dimension_semantics<parallel>], iteration_bounds = array<i64: 1>, scalar_prefetch = 0 : i64, scratch_operands = 0 : i64, tpu.core_type = #tpu.core_type<tc>, window_params = [{transform_indices = @transform_0, window_bounds = array<i64: 16, 32>}, {pipeline_mode = #tpu.pipeline_mode<synchronous>, transform_indices = @transform_1, window_bounds = array<i64: 32, 96>}, {pipeline_mode = #tpu.pipeline_mode<synchronous>, transform_indices = @transform_2, window_bounds = array<i64: 1, 96>}, {transform_indices = @transform_3, window_bounds = array<i64: 16, 96>}]} {
    %c0 = arith.constant 0 : index
    %c0_0 = arith.constant 0 : index
    %0 = vector.load %arg1[%c0, %c0_0] : memref<16x32xf32, #tpu.memory_space<vmem>>, vector<16x32xf32>
    %c0_1 = arith.constant 0 : index
    %c0_2 = arith.constant 0 : index
    %1 = vector.load %arg2[%c0_1, %c0_2] : memref<32x96xf32, #tpu.memory_space<vmem>>, vector<32x96xf32>
    %cst = arith.constant dense<0.000000e+00> : vector<16x96xf32>
    %2 = tpu.matmul %0, %1, %cst {dimension_numbers = #tpu.dot_dimension_numbers<[1], [0], [0], [1], [0, 0, 1, 1], [], []>, precision = #tpu.contract_precision<fp32>} : vector<16x32xf32>, vector<32x96xf32>, vector<16x96xf32> -> vector<16x96xf32>
    %c0_3 = arith.constant 0 : index
    %c0_4 = arith.constant 0 : index
    %3 = vector.load %arg3[%c0_3, %c0_4] : memref<1x96xf32, #tpu.memory_space<vmem>>, vector<1x96xf32>
    %4 = vector.broadcast %3 : vector<1x96xf32> to vector<16x96xf32>
    %5 = arith.addf %2, %4 : vector<16x96xf32>
    %c0_5 = arith.constant 0 : index
    %c0_6 = arith.constant 0 : index
    %6 = vector.load %arg4[%c0_5, %c0_6] : memref<16x96xf32, #tpu.memory_space<vmem>>, vector<16x96xf32>
    tpu.vector_store %arg4[%c0_5, %c0_6], %5 {strides = array<i32>} : memref<16x96xf32, #tpu.memory_space<vmem>>, vector<16x96xf32>,
    return
  }
  func.func @transform_0(%arg0: i32) -> (i32, i32) {
    %c0_i32 = arith.constant 0 : i32
    %c0_i32_0 = arith.constant 0 : i32
    return %arg0, %c0_i32 : i32, i32
  }
  func.func @transform_1(%arg0: i32) -> (i32, i32) {
    %c0_i32 = arith.constant 0 : i32
    %c0_i32_0 = arith.constant 0 : i32
    %c0_i32_1 = arith.constant 0 : i32
    return %c0_i32, %c0_i32_0 : i32, i32
  }
  func.func @transform_2(%arg0: i32) -> (i32, i32) {
    %c0_i32 = arith.constant 0 : i32
    %c0_i32_0 = arith.constant 0 : i32
    %c0_i32_1 = arith.constant 0 : i32
    return %c0_i32, %c0_i32_0 : i32, i32
  }
  func.func @transform_3(%arg0: i32) -> (i32, i32) {
    %c0_i32 = arith.constant 0 : i32
    %c0_i32_0 = arith.constant 0 : i32
    return %arg0, %c0_i32 : i32, i32
  }
}

</mosaic_0001>

<llo_original>
// kernel: tpu_custom_call.1
$region0: #{tpu_custom_call.1}
  #allocation0 [shape = 'u32[]', space=smem, size = 0x4, offset = 0x4, fixed_abs, tag = 'smem constant byte address 0x4 - core index']
  #allocation1 [shape = 'u32[72,128]{1,0:T(1,128)}', space=vmem, size = 0x9000, scoped, tag = 'internal scratch']
  %s0 = inlined_call_operand.hbm [shape: f32[16,32], index: 0, kind: input, shape index: {}]
  %s1 = inlined_call_operand.hbm [shape: f32[32,96], index: 1, kind: input, shape index: {}]
  %s2 = inlined_call_operand.vmem [shape: f32[1,96], index: 2, kind: input, shape index: {}]
  %s3 = inlined_call_operand.hbm [shape: f32[16,96], index: 3, kind: output, shape index: {}]
  %s4 = sld [smem:[#allocation0]]
  $region30: #{tpu_custom_call.1} parent=0
    _
  %s6 = ssub.s32 1, %s4
  %s7 = scalar_select 0, %s6, %s4
  $region1: #{tpu_custom_call.1} parent=0
    #allocation2 [shape = 'u8[8192]{0}', space=vmem, size = 0x2000, scoped, tag = 'input window, operand 0, single buffered']
    #allocation3 [shape = 's32[1]{0}', space=sflag, size = 0x4, scoped, tag = 'scoped memory for tpu_custom_call.1']
    #allocation4 [shape = 's32[1]{0}', space=sflag, size = 0x4, scoped, tag = 'scoped memory for tpu_custom_call.1']
    #allocation5 [shape = 'u8[16384]{0}', space=vmem, size = 0x4000, scoped, tag = 'input window, operand 1, single buffered']
    #allocation6 [shape = 's32[1]{0}', space=sflag, size = 0x4, scoped, tag = 'scoped memory for tpu_custom_call.1']
    #allocation7 [shape = 'u8[8192]{0}', space=vmem, size = 0x2000, scoped, tag = 'output window, operand 0, single buffered']
    %8 = vsyncpa [#allocation3], 0
    %9 = vsyncpa [#allocation6], 0
    %10 = vsyncpa [#allocation4], 0
    // Predicated region
    $region2: #{tpu_custom_call.1} parent=1 // pred_check
      _
    $region3: #{tpu_custom_call.1} parent=1 // pred_check_branch
      %12 = sbr.rel (0) target = $region5
    $region4: #{tpu_custom_call.1} parent=1 // pred_region
      %14 = vsyncadd [#allocation3], 0
      %s15 = sshll.u32 %s0, 4
      %s16 = int_to_ptr.hbm [resolvable:$true] %s15
      %s17 = sshll.u32 [#allocation2], 4
      %s18 = int_to_ptr.vmem [resolvable:$true] %s17
      %23 = dma.hbm_to_vmem [thread:$0]  %s16, 256, %s18, [#allocation3], 128, 128, 8
    $region5: #{tpu_custom_call.1} parent=1 // pred_fallthru
      _
    // Predicated region
    $region6: #{tpu_custom_call.1} parent=1 // pred_check
      _
    $region7: #{tpu_custom_call.1} parent=1 // pred_check_branch
      %25 = sbr.rel (0) target = $region9
    $region8: #{tpu_custom_call.1} parent=1 // pred_region
      %27 = vsyncadd [#allocation6], 0
      %s28 = sshll.u32 %s1, 4
      %s29 = int_to_ptr.hbm [resolvable:$true] %s28
      %s30 = sshll.u32 [#allocation5], 4
      %s31 = int_to_ptr.vmem [resolvable:$true] %s30
      %36 = dma.hbm_to_vmem [thread:$0]  %s29, 512, %s31, [#allocation6], 128, 128, 8
    $region9: #{tpu_custom_call.1} parent=1 // pred_fallthru
      _
    // Predicated region
    $region10: #{tpu_custom_call.1} parent=1 // pred_check
      _
    $region11: #{tpu_custom_call.1} parent=1 // pred_check_branch
      %38 = sbr.rel (0) target = $region13
    $region12: #{tpu_custom_call.1} parent=1 // pred_region
      _
    $region13: #{tpu_custom_call.1} parent=1 // pred_fallthru
      _
    // Predicated region
    $region14: #{tpu_custom_call.1} parent=1 // pred_check
      _
    $region15: #{tpu_custom_call.1} parent=1 // pred_check_branch
      %40 = sbr.rel (0) target = $region17
    $region16: #{tpu_custom_call.1} parent=1 // pred_region
      %42 = dma.done [#allocation3], 256
    $region17: #{tpu_custom_call.1} parent=1 // pred_fallthru
      _
    // Predicated region
    $region18: #{tpu_custom_call.1} parent=1 // pred_check
      _
    $region19: #{tpu_custom_call.1} parent=1 // pred_check_branch
      %44 = sbr.rel (0) target = $region21
    $region20: #{tpu_custom_call.1} parent=1 // pred_region
      %46 = dma.done [#allocation6], 512
    $region21: #{tpu_custom_call.1} parent=1 // pred_fallthru
      _
    %v47 = vld [vmem:[#allocation2] sm:$0xff]
    %v48 = vld [vmem:[#allocation2 + $0x8] sm:$0xff]
    %v49 = vld [vmem:[#allocation5] sm:$0xff]
    %v50 = vld [vmem:[#allocation5 + $0x8] sm:$0xff]
    %v51 = vld [vmem:[#allocation5 + $0x10] sm:$0xff]
    %v52 = vld [vmem:[#allocation5 + $0x18] sm:$0xff]
    %v53 = vld [vmem:[%s2] sm:$0x1]
    %v55 = vperm.slane %v53, 0
    %vm57 = vcmask 261120
    %v59 = vsel %vm57, %v47, 0
    %v62 = vsel %vm57, %v48, 0
    %64 = vmatpush.msra.mxu0 0.0
    %65 = vmatpush.msra.mxu0 0.0
    %66 = vmatpush.msra.mxu0 0.0
    %67 = vmatpush.msra.mxu0 0.0
    %68 = vmatpush.msra.mxu0 0.0
    %69 = vmatpush.msra.mxu0 0.0
    %70 = vmatpush.msra.mxu0 0.0
    %71 = vmatpush.msra.mxu0 0.0
    %72 = vmatpush.msra.mxu0 0.0
    %73 = vmatpush.msra.mxu0 0.0
    %74 = vmatpush.msra.mxu0 0.0
    %75 = vmatpush.msra.mxu0 0.0
    %v76 = vand.u32 %v52, 4294901760
    %77 = vmatpush.msra.mxu0 %v76
    %v78 = vand.u32 %v51, 4294901760
    %79 = vmatpush.msra.mxu0 %v78
    %v80 = vand.u32 %v50, 4294901760
    %81 = vmatpush.msra.mxu0 %v80
    %v82 = vand.u32 %v49, 4294901760
    %83 = vmatpush.msra.mxu0 %v82
    %v84 = vand.u32 %v59, 4294901760
    %v85 = vsub.f32 %v59, %v84
    %v86 = vand.u32 %v85, 4294901760
    %v87 = vsub.f32 %v85, %v86
    %v88 = vand.u32 %v87, 4294901760
    %89 = vmatmul.f32.gmra.mxu0 %v88
    %v90 = vpop.f32.mrf.mxu0
    %v91 = vadd.f32 %v55, %v90
    %v92 = vand.u32 %v62, 4294901760
    %v93 = vsub.f32 %v62, %v92
    %v94 = vand.u32 %v93, 4294901760
    %v95 = vsub.f32 %v93, %v94
    %v96 = vand.u32 %v95, 4294901760
    %97 = vmatmul.f32.gmra.mxu0 %v96
    %v98 = vpop.f32.mrf.mxu0
    %v99 = vadd.f32 %v55, %v98
    %100 = vdwg.mxu0
    %101 = vmatpush.msra.mxu0 0.0
    %102 = vmatpush.msra.mxu0 0.0
    %103 = vmatpush.msra.mxu0 0.0
    %104 = vmatpush.msra.mxu0 0.0
    %105 = vmatpush.msra.mxu0 0.0
    %106 = vmatpush.msra.mxu0 0.0
    %107 = vmatpush.msra.mxu0 0.0
    %108 = vmatpush.msra.mxu0 0.0
    %109 = vmatpush.msra.mxu0 0.0
    %110 = vmatpush.msra.mxu0 0.0
    %111 = vmatpush.msra.mxu0 0.0
    %112 = vmatpush.msra.mxu0 0.0
    %v113 = vand.u32 %v52, 4294901760
    %v114 = vsub.f32 %v52, %v113
    %v115 = vand.u32 %v114, 4294901760
    %v116 = vsub.f32 %v114, %v115
    %v117 = vand.u32 %v116, 4294901760
    %118 = vmatpush.msra.mxu0 %v117
    %v119 = vand.u32 %v51, 4294901760
    %v120 = vsub.f32 %v51, %v119
    %v121 = vand.u32 %v120, 4294901760
    %v122 = vsub.f32 %v120, %v121
    %v123 = vand.u32 %v122, 4294901760
    %124 = vmatpush.msra.mxu0 %v123
    %v125 = vand.u32 %v50, 4294901760
    %v126 = vsub.f32 %v50, %v125
    %v127 = vand.u32 %v126, 4294901760
    %v128 = vsub.f32 %v126, %v127
    %v129 = vand.u32 %v128, 4294901760
    %130 = vmatpush.msra.mxu0 %v129
    %v131 = vand.u32 %v49, 4294901760
    %v132 = vsub.f32 %v49, %v131
    %v133 = vand.u32 %v132, 4294901760
    %v134 = vsub.f32 %v132, %v133
    %v135 = vand.u32 %v134, 4294901760
    %136 = vmatpush.msra.mxu0 %v135
    %v137 = vand.u32 %v59, 4294901760
    %138 = vmatmul.f32.gmra.mxu0 %v137
    %v139 = vpop.f32.mrf.mxu0
    %v140 = vadd.f32 %v91, %v139
    %v141 = vand.u32 %v62, 4294901760
    %142 = vmatmul.f32.gmra.mxu0 %v141
    %v143 = vpop.f32.mrf.mxu0
    %v144 = vadd.f32 %v99, %v143
    %145 = vdwg.mxu0
    %146 = vmatpush.msra.mxu0 0.0
    %147 = vmatpush.msra.mxu0 0.0
    %148 = vmatpush.msra.mxu0 0.0
    %149 = vmatpush.msra.mxu0 0.0
    %150 = vmatpush.msra.mxu0 0.0
    %151 = vmatpush.msra.mxu0 0.0
    %152 = vmatpush.msra.mxu0 0.0
    %153 = vmatpush.msra.mxu0 0.0
    %154 = vmatpush.msra.mxu0 0.0
    %155 = vmatpush.msra.mxu0 0.0
    %156 = vmatpush.msra.mxu0 0.0
    %157 = vmatpush.msra.mxu0 0.0
    %v158 = vand.u32 %v52, 4294901760
    %v159 = vsub.f32 %v52, %v158
    %160 = vmatpush.msra.mxu0 %v159
    %v161 = vand.u32 %v51, 4294901760
    %v162 = vsub.f32 %v51, %v161
    %163 = vmatpush.msra.mxu0 %v162
    %v164 = vand.u32 %v50, 4294901760
    %v165 = vsub.f32 %v50, %v164
    %166 = vmatpush.msra.mxu0 %v165
    %v167 = vand.u32 %v49, 4294901760
    %v168 = vsub.f32 %v49, %v167
    %169 = vmatpush.msra.mxu0 %v168
    %v170 = vand.u32 %v59, 4294901760
    %v171 = vsub.f32 %v59, %v170
    %172 = vmatmul.f32.gmra.mxu0 %v171
    %v173 = vpop.f32.mrf.mxu0
    %v174 = vadd.f32 %v140, %v173
    %v175 = vand.u32 %v62, 4294901760
    %v176 = vsub.f32 %v62, %v175
    %177 = vmatmul.f32.gmra.mxu0 %v176
    %v178 = vpop.f32.mrf.mxu0
    %v179 = vadd.f32 %v144, %v178
    %180 = vdwg.mxu0
    %181 = vmatpush.msra.mxu0 0.0
    %182 = vmatpush.msra.mxu0 0.0
    %183 = vmatpush.msra.mxu0 0.0
    %184 = vmatpush.msra.mxu0 0.0
    %185 = vmatpush.msra.mxu0 0.0
    %186 = vmatpush.msra.mxu0 0.0
    %187 = vmatpush.msra.mxu0 0.0
    %188 = vmatpush.msra.mxu0 0.0
    %189 = vmatpush.msra.mxu0 0.0
    %190 = vmatpush.msra.mxu0 0.0
    %191 = vmatpush.msra.mxu0 0.0
    %192 = vmatpush.msra.mxu0 0.0
    %v193 = vand.u32 %v52, 4294901760
    %194 = vmatpush.msra.mxu0 %v193
    %v195 = vand.u32 %v51, 4294901760
    %196 = vmatpush.msra.mxu0 %v195
    %v197 = vand.u32 %v50, 4294901760
    %198 = vmatpush.msra.mxu0 %v197
    %v199 = vand.u32 %v49, 4294901760
    %200 = vmatpush.msra.mxu0 %v199
    %v201 = vand.u32 %v59, 4294901760
    %v202 = vsub.f32 %v59, %v201
    %v203 = vand.u32 %v202, 4294901760
    %204 = vmatmul.f32.gmra.mxu0 %v203
    %v205 = vpop.f32.mrf.mxu0
    %v206 = vadd.f32 %v174, %v205
    %v207 = vand.u32 %v62, 4294901760
    %v208 = vsub.f32 %v62, %v207
    %v209 = vand.u32 %v208, 4294901760
    %210 = vmatmul.f32.gmra.mxu0 %v209
    %v211 = vpop.f32.mrf.mxu0
    %v212 = vadd.f32 %v179, %v211
    %213 = vdwg.mxu0
    %214 = vmatpush.msra.mxu0 0.0
    %215 = vmatpush.msra.mxu0 0.0
    %216 = vmatpush.msra.mxu0 0.0
    %217 = vmatpush.msra.mxu0 0.0
    %218 = vmatpush.msra.mxu0 0.0
    %219 = vmatpush.msra.mxu0 0.0
    %220 = vmatpush.msra.mxu0 0.0
    %221 = vmatpush.msra.mxu0 0.0
    %222 = vmatpush.msra.mxu0 0.0
    %223 = vmatpush.msra.mxu0 0.0
    %224 = vmatpush.msra.mxu0 0.0
    %225 = vmatpush.msra.mxu0 0.0
    %v226 = vand.u32 %v52, 4294901760
    %v227 = vsub.f32 %v52, %v226
    %v228 = vand.u32 %v227, 4294901760
    %229 = vmatpush.msra.mxu0 %v228
    %v230 = vand.u32 %v51, 4294901760
    %v231 = vsub.f32 %v51, %v230
    %v232 = vand.u32 %v231, 4294901760
    %233 = vmatpush.msra.mxu0 %v232
    %v234 = vand.u32 %v50, 4294901760
    %v235 = vsub.f32 %v50, %v234
    %v236 = vand.u32 %v235, 4294901760
    %237 = vmatpush.msra.mxu0 %v236
    %v238 = vand.u32 %v49, 4294901760
    %v239 = vsub.f32 %v49, %v238
    %v240 = vand.u32 %v239, 4294901760
    %241 = vmatpush.msra.mxu0 %v240
    %v242 = vand.u32 %v59, 4294901760
    %243 = vmatmul.f32.gmra.mxu0 %v242
    %v244 = vpop.f32.mrf.mxu0
    %v245 = vadd.f32 %v206, %v244
    %v246 = vand.u32 %v62, 4294901760
    %247 = vmatmul.f32.gmra.mxu0 %v246
    %v248 = vpop.f32.mrf.mxu0
    %v249 = vadd.f32 %v212, %v248
    %250 = vdwg.mxu0
    %251 = vmatpush.msra.mxu0 0.0
    %252 = vmatpush.msra.mxu0 0.0
    %253 = vmatpush.msra.mxu0 0.0
    %254 = vmatpush.msra.mxu0 0.0
    %255 = vmatpush.msra.mxu0 0.0
    %256 = vmatpush.msra.mxu0 0.0
    %257 = vmatpush.msra.mxu0 0.0
    %258 = vmatpush.msra.mxu0 0.0
    %259 = vmatpush.msra.mxu0 0.0
    %260 = vmatpush.msra.mxu0 0.0
    %261 = vmatpush.msra.mxu0 0.0
    %262 = vmatpush.msra.mxu0 0.0
    %v263 = vand.u32 %v52, 4294901760
    %264 = vmatpush.msra.mxu0 %v263
    %v265 = vand.u32 %v51, 4294901760
    %266 = vmatpush.msra.mxu0 %v265
    %v267 = vand.u32 %v50, 4294901760
    %268 = vmatpush.msra.mxu0 %v267
    %v269 = vand.u32 %v49, 4294901760
    %270 = vmatpush.msra.mxu0 %v269
    %v271 = vand.u32 %v59, 4294901760
    %272 = vmatmul.f32.gmra.mxu0 %v271
    %v273 = vpop.f32.mrf.mxu0
    %v274 = vadd.f32 %v245, %v273
    %v275 = vand.u32 %v62, 4294901760
    %276 = vmatmul.f32.gmra.mxu0 %v275
    %v277 = vpop.f32.mrf.mxu0
    %v278 = vadd.f32 %v249, %v277
    %279 = vdwg.mxu0
    %vm280 = vcmask 785408
    %281 = vst.msk [vmem:[#allocation7] sm:$0xff] %vm280, %v274
    %282 = vst.msk [vmem:[#allocation7 + $0x8] sm:$0xff] %vm280, %v278
    // Predicated region
    $region22: #{tpu_custom_call.1} parent=1 // pred_check
      _
    $region23: #{tpu_custom_call.1} parent=1 // pred_check_branch
      %284 = sbr.rel (0) target = $region25
    $region24: #{tpu_custom_call.1} parent=1 // pred_region
      %286 = vsyncadd [#allocation4], 0
      %s287 = sshll.u32 [#allocation7], 4
      %s288 = int_to_ptr.vmem [resolvable:$true] %s287
      %s289 = sshll.u32 %s3, 4
      %s290 = int_to_ptr.hbm [resolvable:$true] %s289
      %295 = dma.vmem_to_hbm [thread:$0]  %s288, 256, %s290, [#allocation4], 128, 128, 8
    $region25: #{tpu_custom_call.1} parent=1 // pred_fallthru
      _
    // Predicated region
    $region26: #{tpu_custom_call.1} parent=1 // pred_check
      _
    $region27: #{tpu_custom_call.1} parent=1 // pred_check_branch
      %297 = sbr.rel (0) target = $region29
    $region28: #{tpu_custom_call.1} parent=1 // pred_region
      %299 = dma.done [#allocation4], 256
    $region29: #{tpu_custom_call.1} parent=1 // pred_fallthru
      _
    %300 = vsyncpa [#allocation3], 1
    %301 = vsyncpa [#allocation6], 1
    %302 = vsyncpa [#allocation4], 1

</llo_original>
